<compile_context>
chip_gen: v6e
topology: v6e:2x2x1
jax: 0.10.0
libtpu: 0.0.40
codegen_flags: <defaults>
</compile_context>

<pallas_src>
import functools

import jax
import jax.numpy as jnp
from jax.experimental import pallas as pl
from jax.experimental.pallas import tpu as pltpu

_LANE = 128                              # vreg lane width (last dim)
_SUBLANE = 8                             # vreg sublane width (second-to-last dim)
_SMALL_PATH_BYTES = 16 * 1024 * 1024     # grid-less path threshold
_TILED_VMEM_CAP = 20 * 1024 * 1024       # double-buffered tile footprint cap
_VMEM_LIMIT = 32 * 1024 * 1024           # explicit scoped-VMEM limit (safe on v5e/v6e/v7x)


def _ceil_to(v, m):
    return (v + m - 1) // m * m


def _pad2(a, rows, cols):
    r, c = a.shape
    if r == rows and c == cols:
        return a                          # no-op when already aligned: no extra HBM traffic
    return jnp.pad(a, ((0, rows - r), (0, cols - c)))


def _cost(M, K, N, in_bytes):
    return pl.CostEstimate(
        flops=2 * M * K * N,
        transcendentals=0,
        bytes_accessed=in_bytes * (M * K + K * N) + 4 * (N + M * N),
    )


def _largest_divisor_tile(dim, align, cap):
    """Largest multiple of `align` that divides `dim` and is <= cap (dim % align == 0)."""
    cap = max(align, min(cap, dim))
    t = (cap // align) * align
    while t > align:
        if dim % t == 0:
            return t
        t -= align
    return align


def _select_tiles(M_pad, K_pad, N_pad, in_bytes):
    tm = _largest_divisor_tile(M_pad, _SUBLANE, 1024)   # cover the batch -> weight streams once
    tn = _largest_divisor_tile(N_pad, _LANE, 512)
    tk = _largest_divisor_tile(K_pad, _LANE, 1024)

    # Keep >= 2 tiles on a 'parallel' axis so v7x's second TensorCore is not idle.
    if M_pad // tm == 1 and N_pad // tn == 1:
        if N_pad >= 2 * _LANE:
            tn = _largest_divisor_tile(N_pad, _LANE, N_pad // 2)
        elif M_pad >= 2 * _SUBLANE:
            tm = _largest_divisor_tile(M_pad, _SUBLANE, M_pad // 2)

    # Shrink until the double-buffered footprint fits the cross-generation VMEM cap.
    def footprint(a, b, c):
        # 2 x (x tile + w tile + bias tile) inputs + 2 x output tile (no scratch).
        return in_bytes * 2 * (a * c + c * b) + 4 * (2 * b + 2 * a * b)

    while footprint(tm, tn, tk) > _TILED_VMEM_CAP:
        if tk > _LANE:
            tk = _largest_divisor_tile(K_pad, _LANE, tk // 2)
        elif tn > _LANE:
            tn = _largest_divisor_tile(N_pad, _LANE, tn // 2)
        elif tm > _SUBLANE:
            tm = _largest_divisor_tile(M_pad, _SUBLANE, tm // 2)
        else:
            break
    return tm, tn, tk


# ---------------------------------------------------------------------------
# Small path: single VMEM-resident tile, no grid.
# ---------------------------------------------------------------------------
def _linear_small_kernel(x_ref, w_ref, b_ref, o_ref):
    acc = jnp.dot(x_ref[...], w_ref[...], preferred_element_type=jnp.float32)
    o_ref[...] = (acc + b_ref[...]).astype(o_ref.dtype)   # bias add rides a free VPU slot


def _linear_small(xp, wp, bp):
    M, K = xp.shape
    _, N = wp.shape
    vmem = pl.BlockSpec(memory_space=pltpu.MemorySpace.VMEM)
    return pl.pallas_call(
        _linear_small_kernel,
        out_shape=jax.ShapeDtypeStruct((M, N), jnp.float32),
        in_specs=[vmem, vmem, vmem],
        out_specs=pl.BlockSpec(memory_space=pltpu.MemorySpace.VMEM),
        compiler_params=pltpu.CompilerParams(vmem_limit_bytes=_VMEM_LIMIT),
        cost_estimate=_cost(M, K, N, xp.dtype.itemsize),
    )(xp, wp, bp)


# ---------------------------------------------------------------------------
# Tiled path: K-reduction grid, accumulate directly into the f32 output block
# (resident across the K axis) — no accumulator scratch.
# ---------------------------------------------------------------------------
def _linear_tiled_kernel(x_ref, w_ref, b_ref, o_ref):
    k = pl.program_id(2)
    partial = jnp.dot(x_ref[...], w_ref[...], preferred_element_type=jnp.float32)

    @pl.when(k == 0)
    def _():
        o_ref[...] = partial + b_ref[...]      # init + bias folded into first K step

    @pl.when(k > 0)
    def _():
        o_ref[...] = o_ref[...] + partial


def _linear_tiled(xp, wp, bp, tm, tn, tk):
    M, K = xp.shape
    _, N = wp.shape
    grid = (M // tm, N // tn, K // tk)
    return pl.pallas_call(
        _linear_tiled_kernel,
        out_shape=jax.ShapeDtypeStruct((M, N), jnp.float32),
        grid_spec=pltpu.PrefetchScalarGridSpec(
            num_scalar_prefetch=0,
            grid=grid,
            in_specs=[
                pl.BlockSpec((tm, tk), lambda i, j, k: (i, k)),
                pl.BlockSpec((tk, tn), lambda i, j, k: (k, j)),
                pl.BlockSpec((1, tn), lambda i, j, k: (0, j)),   # bias: constant across k
            ],
            out_specs=pl.BlockSpec((tm, tn), lambda i, j, k: (i, j)),
        ),
        compiler_params=pltpu.CompilerParams(
            dimension_semantics=("parallel", "parallel", "arbitrary"),
            vmem_limit_bytes=_VMEM_LIMIT,
        ),
        cost_estimate=_cost(M, K, N, xp.dtype.itemsize),
    )(xp, wp, bp)


# ---------------------------------------------------------------------------
# Public wrapper: y = x @ w + b   (x:(B,In), w:(In,Out), b:(1,Out))
# ---------------------------------------------------------------------------
@functools.partial(jax.jit, static_argnames=("use_bf16_inputs",))
def linear_pallas(x, w, b, use_bf16_inputs=False):
    B, In = x.shape
    In2, Out = w.shape
    assert In == In2
    b = b.reshape(1, Out)

    # Minimal lane/sublane padding only: lane-dense output stores, full MXU tiles,
    # and zero-padding is exact for matmul + bias.  _pad2 is a no-op when aligned.
    M_pad = _ceil_to(B, _SUBLANE)
    K_pad = _ceil_to(In, _LANE)
    N_pad = _ceil_to(Out, _LANE)

    xp = _pad2(x, M_pad, K_pad)
    wp = _pad2(w, K_pad, N_pad)
    bp = _pad2(b, 1, N_pad)

    if use_bf16_inputs:
        # Optional: native-bf16 MXU on v6e/v7x (f32 accumulation kept). Off by
        # default to preserve exact f32 nn.Linear numerics.
        xp = xp.astype(jnp.bfloat16)
        wp = wp.astype(jnp.bfloat16)

    in_bytes = xp.dtype.itemsize
    total_bytes = in_bytes * (M_pad * K_pad + K_pad * N_pad) + 4 * (N_pad + M_pad * N_pad)
    if total_bytes <= _SMALL_PATH_BYTES:
        yp = _linear_small(xp, wp, bp)
    else:
        tm, tn, tk = _select_tiles(M_pad, K_pad, N_pad, in_bytes)
        yp = _linear_tiled(xp, wp, bp, tm, tn, tk)

    if M_pad == B and N_pad == Out:
        return yp
    return yp[:B, :Out]


if __name__ == "__main__":
    key = jax.random.PRNGKey(0)

    # --- Small shapes consistent with Net(num_of_input, num_of_output) ---
    batch, num_of_input, num_of_output = 8, 32, 16
    kx, kw, kb = jax.random.split(key, 3)
    bound = 1.0 / jnp.sqrt(jnp.float32(num_of_input))
    x = jax.random.normal(kx, (batch, num_of_input), dtype=jnp.float32)
    w = jax.random.uniform(kw, (num_of_input, num_of_output),
                           minval=-bound, maxval=bound, dtype=jnp.float32)
    b = jax.random.uniform(kb, (1, num_of_output),
                           minval=-bound, maxval=bound, dtype=jnp.float32)

    y = linear_pallas(x, w, b)
    jax.block_until_ready(y)
    y_ref = x @ w + b
    assert y.shape == y_ref.shape
    assert jnp.allclose(y, y_ref, atol=1e-5, rtol=1e-5), "small-path mismatch"

    # --- Larger shapes to exercise the tiled grid path (>16 MiB operands) ---
    B2, In2, Out2 = 1024, 2048, 1024
    k2x, k2w, k2b = jax.random.split(jax.random.PRNGKey(1), 3)
    bound2 = 1.0 / jnp.sqrt(jnp.float32(In2))
    x2 = jax.random.normal(k2x, (B2, In2), dtype=jnp.float32)
    w2 = jax.random.uniform(k2w, (In2, Out2), minval=-bound2, maxval=bound2,
                            dtype=jnp.float32)
    b2 = jax.random.uniform(k2b, (1, Out2), minval=-bound2, maxval=bound2,
                            dtype=jnp.float32)

    y2 = linear_pallas(x2, w2, b2)
    jax.block_until_ready(y2)
    y2_ref = x2 @ w2 + b2
    assert jnp.allclose(y2, y2_ref, atol=1e-3, rtol=1e-3), "tiled-path mismatch"

    print("KERNEL_OK")
</pallas_src>

<mosaic_0001>
module attributes {stable_mosaic.version = 11 : i64} {
  func.func @_linear_small_kernel(%arg0: memref<8x128xf32, #tpu.memory_space<vmem>>, %arg1: memref<128x128xf32, #tpu.memory_space<vmem>>, %arg2: memref<1x128xf32, #tpu.memory_space<vmem>>, %arg3: memref<8x128xf32, #tpu.memory_space<vmem>>) attributes {dimension_semantics = [], scalar_prefetch = 0 : i64, scratch_operands = 0 : i64, tpu.core_type = #tpu.core_type<tc>} {
    %c0 = arith.constant 0 : index
    %c0_0 = arith.constant 0 : index
    %0 = vector.load %arg0[%c0, %c0_0] : memref<8x128xf32, #tpu.memory_space<vmem>>, vector<8x128xf32>
    %c0_1 = arith.constant 0 : index
    %c0_2 = arith.constant 0 : index
    %1 = vector.load %arg1[%c0_1, %c0_2] : memref<128x128xf32, #tpu.memory_space<vmem>>, vector<128x128xf32>
    %cst = arith.constant dense<0.000000e+00> : vector<8x128xf32>
    %2 = tpu.matmul %0, %1, %cst {dimension_numbers = #tpu.dot_dimension_numbers<[1], [0], [0], [1], [0, 0, 1, 1], [], []>} : vector<8x128xf32>, vector<128x128xf32>, vector<8x128xf32> -> vector<8x128xf32>
    %c0_3 = arith.constant 0 : index
    %c0_4 = arith.constant 0 : index
    %3 = vector.load %arg2[%c0_3, %c0_4] : memref<1x128xf32, #tpu.memory_space<vmem>>, vector<1x128xf32>
    %4 = vector.broadcast %3 : vector<1x128xf32> to vector<8x128xf32>
    %5 = arith.addf %2, %4 : vector<8x128xf32>
    %c0_5 = arith.constant 0 : index
    %c0_6 = arith.constant 0 : index
    %6 = vector.load %arg3[%c0_5, %c0_6] : memref<8x128xf32, #tpu.memory_space<vmem>>, vector<8x128xf32>
    tpu.vector_store %arg3[%c0_5, %c0_6], %5 {strides = array<i32>} : memref<8x128xf32, #tpu.memory_space<vmem>>, vector<8x128xf32>,
    return
  }
}

</mosaic_0001>

<llo_original>
// kernel: linear_pallas.1
$region0: #{linear_pallas.1}
  #allocation0 [shape = 'u32[]', space=smem, size = 0x4, offset = 0x4, fixed_abs, tag = 'smem constant byte address 0x4 - core index']
  #allocation1 [shape = 'u32[144,128]{1,0:T(1,128)}', space=vmem, size = 0x12000, scoped, tag = 'internal scratch']
  %s0 = inlined_call_operand.vmem [shape: f32[8,128], index: 0, kind: input, shape index: {}]
  %s1 = inlined_call_operand.vmem [shape: f32[128,128], index: 1, kind: input, shape index: {}]
  %s2 = inlined_call_operand.vmem [shape: f32[1,128], index: 2, kind: input, shape index: {}]
  %s3 = inlined_call_operand.hbm [shape: f32[8,128], index: 3, kind: output, shape index: {}]
  %s4 = sld [smem:[#allocation0]]
  $region22: #{linear_pallas.1} parent=0
    _
  %s6 = ssub.s32 1, %s4
  %s7 = scalar_select 0, %s6, %s4
  $region1: #{linear_pallas.1} parent=0
    #allocation2 [shape = 'u8[4096]{0}', space=vmem, size = 0x1000, scoped, tag = 'output window, operand 0, single buffered']
    #allocation3 [shape = 's32[1]{0}', space=sflag, size = 0x4, scoped, tag = 'scoped memory for linear_pallas.1']
    %8 = vsyncpa [#allocation3], 0
    // Predicated region
    $region2: #{linear_pallas.1} parent=1 // pred_check
      _
    $region3: #{linear_pallas.1} parent=1 // pred_check_branch
      %10 = sbr.rel (0) target = $region5
    $region4: #{linear_pallas.1} parent=1 // pred_region
      _
    $region5: #{linear_pallas.1} parent=1 // pred_fallthru
      _
    // Predicated region
    $region6: #{linear_pallas.1} parent=1 // pred_check
      _
    $region7: #{linear_pallas.1} parent=1 // pred_check_branch
      %12 = sbr.rel (0) target = $region9
    $region8: #{linear_pallas.1} parent=1 // pred_region
      _
    $region9: #{linear_pallas.1} parent=1 // pred_fallthru
      _
    // Predicated region
    $region10: #{linear_pallas.1} parent=1 // pred_check
      _
    $region11: #{linear_pallas.1} parent=1 // pred_check_branch
      %14 = sbr.rel (0) target = $region13
    $region12: #{linear_pallas.1} parent=1 // pred_region
      _
    $region13: #{linear_pallas.1} parent=1 // pred_fallthru
      _
    %v15 = vld [vmem:[%s0] sm:$0xff]
    %v16 = vld [vmem:[%s1] sm:$0xff]
    %v17 = vld [vmem:[%s1 + $0x8] sm:$0xff]
    %v18 = vld [vmem:[%s1 + $0x10] sm:$0xff]
    %v19 = vld [vmem:[%s1 + $0x18] sm:$0xff]
    %v20 = vld [vmem:[%s1 + $0x20] sm:$0xff]
    %v21 = vld [vmem:[%s1 + $0x28] sm:$0xff]
    %v22 = vld [vmem:[%s1 + $0x30] sm:$0xff]
    %v23 = vld [vmem:[%s1 + $0x38] sm:$0xff]
    %v24 = vld [vmem:[%s1 + $0x40] sm:$0xff]
    %v25 = vld [vmem:[%s1 + $0x48] sm:$0xff]
    %v26 = vld [vmem:[%s1 + $0x50] sm:$0xff]
    %v27 = vld [vmem:[%s1 + $0x58] sm:$0xff]
    %v28 = vld [vmem:[%s1 + $0x60] sm:$0xff]
    %v29 = vld [vmem:[%s1 + $0x68] sm:$0xff]
    %v30 = vld [vmem:[%s1 + $0x70] sm:$0xff]
    %v31 = vld [vmem:[%s1 + $0x78] sm:$0xff]
    %v32 = vld [vmem:[%s2] sm:$0x1]
    %v34 = vlaneseq
    %v35 = vshrl.u32 %v34, 7
    %v36 = vsub.s32 0, %v35
    %v37 = vrot.slane %v32, %v36
    %39 = vmatprep.subr.mxu0 0.0
    %40 = vmatpush1.msra.mxu0 %v31
    %41 = vmatprep.subr.mxu0 0.0
    %42 = vmatpush1.msra.mxu0 %v30
    %43 = vmatprep.subr.mxu0 0.0
    %44 = vmatpush1.msra.mxu0 %v29
    %45 = vmatprep.subr.mxu0 0.0
    %46 = vmatpush1.msra.mxu0 %v28
    %47 = vmatprep.subr.mxu0 0.0
    %48 = vmatpush1.msra.mxu0 %v27
    %49 = vmatprep.subr.mxu0 0.0
    %50 = vmatpush1.msra.mxu0 %v26
    %51 = vmatprep.subr.mxu0 0.0
    %52 = vmatpush1.msra.mxu0 %v25
    %53 = vmatprep.subr.mxu0 0.0
    %54 = vmatpush1.msra.mxu0 %v24
    %55 = vmatprep.subr.mxu0 0.0
    %56 = vmatpush1.msra.mxu0 %v23
    %57 = vmatprep.subr.mxu0 0.0
    %58 = vmatpush1.msra.mxu0 %v22
    %59 = vmatprep.subr.mxu0 0.0
    %60 = vmatpush1.msra.mxu0 %v21
    %61 = vmatprep.subr.mxu0 0.0
    %62 = vmatpush1.msra.mxu0 %v20
    %63 = vmatprep.subr.mxu0 0.0
    %64 = vmatpush1.msra.mxu0 %v19
    %65 = vmatprep.subr.mxu0 0.0
    %66 = vmatpush1.msra.mxu0 %v18
    %67 = vmatprep.subr.mxu0 0.0
    %68 = vmatpush1.msra.mxu0 %v17
    %69 = vmatprep.subr.mxu0 0.0
    %70 = vmatpush1.msra.mxu0 %v16
    %71 = vmatprep.subr.mxu0 0.0
    %72 = vmatpush2.msra.mxu0 0.0
    %73 = vmatprep.subr.mxu0 0.0
    %74 = vmatpush2.msra.mxu0 0.0
    %75 = vmatprep.subr.mxu0 0.0
    %76 = vmatpush2.msra.mxu0 0.0
    %77 = vmatprep.subr.mxu0 0.0
    %78 = vmatpush2.msra.mxu0 0.0
    %79 = vmatprep.subr.mxu0 0.0
    %80 = vmatpush2.msra.mxu0 0.0
    %81 = vmatprep.subr.mxu0 0.0
    %82 = vmatpush2.msra.mxu0 0.0
    %83 = vmatprep.subr.mxu0 0.0
    %84 = vmatpush2.msra.mxu0 0.0
    %85 = vmatprep.subr.mxu0 0.0
    %86 = vmatpush2.msra.mxu0 0.0
    %87 = vmatprep.subr.mxu0 0.0
    %88 = vmatpush2.msra.mxu0 0.0
    %89 = vmatprep.subr.mxu0 0.0
    %90 = vmatpush2.msra.mxu0 0.0
    %91 = vmatprep.subr.mxu0 0.0
    %92 = vmatpush2.msra.mxu0 0.0
    %93 = vmatprep.subr.mxu0 0.0
    %94 = vmatpush2.msra.mxu0 0.0
    %95 = vmatprep.subr.mxu0 0.0
    %96 = vmatpush2.msra.mxu0 0.0
    %97 = vmatprep.subr.mxu0 0.0
    %98 = vmatpush2.msra.mxu0 0.0
    %99 = vmatprep.subr.mxu0 0.0
    %100 = vmatpush2.msra.mxu0 0.0
    %101 = vmatprep.subr.mxu0 0.0
    %102 = vmatpush2.msra.mxu0 0.0
    %103 = vmatprep.mubr.f32.mxu0 0.0
    %104 = vmatmul.mubr.f32.gmra.mxu0 %v15
    %v105 = vpop.f32.mrf.mxu0
    %v106 = vadd.f32 %v37, %v105
    %v107 = vpop.f32.mrf.mxu0
    %108 = vdwg.mxu0
    %109 = vst [vmem:[#allocation2] sm:$0xff] %v106
    // Predicated region
    $region14: #{linear_pallas.1} parent=1 // pred_check
      _
    $region15: #{linear_pallas.1} parent=1 // pred_check_branch
      %111 = sbr.rel (0) target = $region17
    $region16: #{linear_pallas.1} parent=1 // pred_region
      %s113 = ssub.s32 128, 128
      %114 = vsyncadd [#allocation3], %s113
      %s116 = sshll.u32 [#allocation2], 4
      %s117 = int_to_ptr.vmem [resolvable:$true] %s116
      %119 = dma.vmem_to_hbm [thread:$0]  %s117, 128, %s3, [#allocation3]
    $region17: #{linear_pallas.1} parent=1 // pred_fallthru
      _
    // Predicated region
    $region18: #{linear_pallas.1} parent=1 // pred_check
      _
    $region19: #{linear_pallas.1} parent=1 // pred_check_branch
      %121 = sbr.rel (0) target = $region21
    $region20: #{linear_pallas.1} parent=1 // pred_region
      %122 = dma.done [#allocation3], 128
    $region21: #{linear_pallas.1} parent=1 // pred_fallthru
      _
    %123 = vsyncpa [#allocation3], 1

</llo_original>
